<compile_context>
chip_gen: v7x
topology: tpu7x:2x2x1
jax: 0.10.0
libtpu: 0.0.40
codegen_flags: <defaults>
</compile_context>

<pallas_src>
import jax
import jax.numpy as jnp
import numpy as np
from jax.experimental import pallas as pl
from jax.experimental.pallas import tpu as pltpu

_LANES = 128


def _reward_kernel_iso(params_ref, in_ref, o_ref):
    """Fast path: Q = q*I (q01+q10==0).  exp(k0 + k1*cos(th - th_t) + k2*u^2)."""
    th_t = params_ref[0]
    k0 = params_ref[1]          # -q/4
    k1 = params_ref[2]          #  q/4
    k2 = params_ref[3]          # -r/2
    th = in_ref[0]              # [tb, 128] theta slab
    u = in_ref[1]               # [tb, 128] torque slab
    o_ref[...] = jnp.exp(k0 + k1 * jnp.cos(th - th_t) + (k2 * u) * u)


def _reward_kernel_general(params_ref, in_ref, o_ref):
    """General Q.  Coefficients already carry the minus sign -> exp(sum)."""
    s_t = params_ref[0]         # sin(th_t)
    c_t = params_ref[1]         # cos(th_t)
    na = params_ref[2]          # -q00/8
    nb = params_ref[3]          #  (q01+q10)/8
    nc = params_ref[4]          # -q11/8
    nr = params_ref[5]          # -r00/2
    th = in_ref[0]
    u = in_ref[1]
    e0 = jnp.sin(th) - s_t
    e1 = jnp.cos(th) - c_t
    s = e0 * (na * e0 + nb * e1) + (nc * e1) * e1 + (nr * u) * u
    o_ref[...] = jnp.exp(s)


def pendulum_reward(x, u, Q, R, target, pole_length, *, block_rows=4096):
    """Pallas TPU implementation of PendulumReward.forward. Returns (N, 1) f32."""
    # --- glue: dtype / shape normalization (mirrors the torch module) ---
    x = jnp.asarray(x, jnp.float32)
    u = jnp.asarray(u, jnp.float32)
    if x.ndim == 1:
        x = x[None, :]
    if u.ndim == 1:
        u = u[None, :]
    assert x.shape[-1] == 2, "expected pendulum state columns [theta, theta_dot]"
    assert u.shape[-1] == 1, "R is 1x1 -> control must have a single column"
    N = x.shape[0]
    assert u.shape[0] == N

    Q = jnp.asarray(Q, jnp.float32).reshape(2, 2)
    R = jnp.asarray(R, jnp.float32).reshape(1, 1)
    th_t = jnp.asarray(target, jnp.float32).reshape(-1)[0]
    # pole_length cancels exactly in delta = (pole_tip - target_tip)/(2L).
    del pole_length

    # --- glue: host-side gate for the isotropic-Q fast path (Q is a concrete
    #     module parameter in practice; fall back to the general kernel if not).
    try:
        Q_np = np.asarray(jax.device_get(Q), np.float64)
        iso = (Q_np[0, 0] == Q_np[1, 1]) and (Q_np[0, 1] + Q_np[1, 0] == 0.0)
    except Exception:
        iso = False

    zero = jnp.float32(0.0)
    if iso:
        q = Q[0, 0]
        params = jnp.stack([th_t, -q / 4.0, q / 4.0, -R[0, 0] / 2.0,
                            zero, zero, zero, zero]).astype(jnp.float32)
        kernel = _reward_kernel_iso
    else:
        params = jnp.stack([jnp.sin(th_t), jnp.cos(th_t),
                            -Q[0, 0] / 8.0, (Q[0, 1] + Q[1, 0]) / 8.0,
                            -Q[1, 1] / 8.0, -R[0, 0] / 2.0,
                            zero, zero]).astype(jnp.float32)
        kernel = _reward_kernel_general

    # --- glue: lane-dense layout.  theta_dot is never read; theta and u are
    #     packed into a single (2, rows, 128) slab with ONE pad op.  Rows are
    #     only padded to a sublane multiple of 8 (no pad-to-tb).
    rows = max(int(pl.cdiv(N, _LANES)), 1)
    rows8 = ((rows + 7) // 8) * 8
    tb = max(8, (int(block_rows) // 8) * 8)
    tb = min(tb, rows8)
    n_pad = rows8 * _LANES

    packed = jnp.stack([x[:, 0], u[:, 0]])                # (2, N)
    if n_pad != N:
        packed = jnp.pad(packed, ((0, 0), (0, n_pad - N)))
    packed = packed.reshape(2, rows8, _LANES)

    grid = (int(pl.cdiv(rows8, tb)),)

    # 2x double-buffered (input block + output block) plus headroom; explicit so
    # big blocks remain portable to v5e's 16 MiB default scoped-VMEM limit.
    vmem_bytes = 2 * (2 * tb * _LANES * 4 + tb * _LANES * 4) + (4 << 20)
    vmem_bytes = int(min(max(vmem_bytes, 16 << 20), 56 << 20))

    out = pl.pallas_call(
        kernel,
        out_shape=jax.ShapeDtypeStruct((rows8, _LANES), jnp.float32),
        grid=grid,
        in_specs=[
            pl.BlockSpec(memory_space=pltpu.MemorySpace.SMEM),       # packed scalars
            pl.BlockSpec((2, tb, _LANES), lambda i: (0, i, 0)),      # [theta; u] slab
        ],
        out_specs=pl.BlockSpec((tb, _LANES), lambda i: (i, 0)),      # lane-dense out
        compiler_params=pltpu.CompilerParams(
            dimension_semantics=("parallel",),                       # v7x 2-TC split
            vmem_limit_bytes=vmem_bytes),
    )(params, packed)

    # --- glue: strip padding, restore [N, 1] reward shape ---
    return out.reshape(-1)[:N].reshape(N, 1)


def _reference(x, u, Q, R, target, pole_length):
    """Pure-JAX reference mirroring the torch forward, for validation."""
    x = jnp.asarray(x, jnp.float32)
    u = jnp.asarray(u, jnp.float32)
    Q = jnp.asarray(Q, jnp.float32)
    R = jnp.asarray(R, jnp.float32)
    L = jnp.float32(pole_length)
    target = jnp.asarray(target, jnp.float32).reshape(1, -1)
    tgt_tip = jnp.concatenate(
        [L * jnp.sin(target[:, 0:1]), -L * jnp.cos(target[:, 0:1])], axis=-1)
    pole_tip = jnp.concatenate(
        [L * jnp.sin(x[:, 0:1]), -L * jnp.cos(x[:, 0:1])], axis=-1)
    delta = (pole_tip - tgt_tip) / (2.0 * L)
    cost = 0.5 * ((delta @ Q * delta).sum(-1, keepdims=True)
                  + (u @ R * u).sum(-1, keepdims=True))
    return jnp.exp(-cost)


if __name__ == "__main__":
    # Deterministic parameters (module __init__ defaults).
    pole_length = 0.5
    target = jnp.array([np.pi, 0.0], jnp.float32)
    Q = 4.0 * jnp.eye(2, dtype=jnp.float32)
    R = 1e-4 * jnp.eye(1, dtype=jnp.float32)

    # Deterministic inputs: pendulum state [theta, theta_dot], control [torque].
    # N is not a multiple of 128 to exercise the padding / ragged-block path.
    key = jax.random.PRNGKey(0)
    kx, ku = jax.random.split(key)
    N = 2500
    x = jax.random.uniform(kx, (N, 2), jnp.float32, minval=-np.pi, maxval=np.pi)
    u = jax.random.uniform(ku, (N, 1), jnp.float32, minval=-2.0, maxval=2.0)

    ref = _reference(x, u, Q, R, target, pole_length)

    # 1) default config: isotropic-Q fast path, single large block.
    out = pendulum_reward(x, u, Q, R, target, pole_length)
    jax.block_until_ready(out)
    np.testing.assert_allclose(np.asarray(out), np.asarray(ref), rtol=2e-5, atol=2e-5)

    # 2) tiny blocks: multi-step grid with a ragged (masked) last block.
    out2 = pendulum_reward(x, u, Q, R, target, pole_length, block_rows=16)
    jax.block_until_ready(out2)
    np.testing.assert_allclose(np.asarray(out2), np.asarray(ref), rtol=2e-5, atol=2e-5)

    # 3) non-isotropic Q exercises the general kernel path.
    Qg = jnp.array([[4.0, 0.5], [0.3, 3.0]], jnp.float32)
    refg = _reference(x, u, Qg, R, target, pole_length)
    outg = pendulum_reward(x, u, Qg, R, target, pole_length, block_rows=16)
    jax.block_until_ready(outg)
    np.testing.assert_allclose(np.asarray(outg), np.asarray(refg), rtol=2e-5, atol=2e-5)

    print("KERNEL_OK")
</pallas_src>

<mosaic_0001>
module attributes {stable_mosaic.version = 11 : i64} {
  func.func @_reward_kernel_iso(%arg0: i32, %arg1: memref<8xf32, #tpu.memory_space<smem>>, %arg2: memref<2x24x128xf32, #tpu.memory_space<vmem>>, %arg3: memref<24x128xf32, #tpu.memory_space<vmem>>) attributes {dimension_semantics = [#tpu.dimension_semantics<parallel>], iteration_bounds = array<i64: 1>, scalar_prefetch = 0 : i64, scratch_operands = 0 : i64, tpu.core_type = #tpu.core_type<tc>, window_params = [{transform_indices = @transform_0, window_bounds = array<i64: 8>}, {transform_indices = @transform_1, window_bounds = array<i64: 2, 24, 128>}, {transform_indices = @transform_2, window_bounds = array<i64: 24, 128>}]} {
    %c0 = arith.constant 0 : index
    %0 = memref.load %arg1[%c0] : memref<8xf32, #tpu.memory_space<smem>>
    %c1 = arith.constant 1 : index
    %1 = memref.load %arg1[%c1] : memref<8xf32, #tpu.memory_space<smem>>
    %c2 = arith.constant 2 : index
    %2 = memref.load %arg1[%c2] : memref<8xf32, #tpu.memory_space<smem>>
    %c3 = arith.constant 3 : index
    %3 = memref.load %arg1[%c3] : memref<8xf32, #tpu.memory_space<smem>>
    %c0_0 = arith.constant 0 : index
    %c0_1 = arith.constant 0 : index
    %c0_2 = arith.constant 0 : index
    %4 = vector.load %arg2[%c0_0, %c0_1, %c0_2] : memref<2x24x128xf32, #tpu.memory_space<vmem>>, vector<1x24x128xf32>
    %5 = vector.shape_cast %4 : vector<1x24x128xf32> to vector<24x128xf32>
    %c1_3 = arith.constant 1 : index
    %c0_4 = arith.constant 0 : index
    %c0_5 = arith.constant 0 : index
    %6 = vector.load %arg2[%c1_3, %c0_4, %c0_5] : memref<2x24x128xf32, #tpu.memory_space<vmem>>, vector<1x24x128xf32>
    %7 = vector.shape_cast %6 : vector<1x24x128xf32> to vector<24x128xf32>
    %8 = vector.broadcast %0 : f32 to vector<24x128xf32>
    %9 = arith.subf %5, %8 : vector<24x128xf32>
    %10 = math.cos %9 : vector<24x128xf32>
    %11 = vector.broadcast %2 : f32 to vector<24x128xf32>
    %12 = arith.mulf %11, %10 : vector<24x128xf32>
    %13 = vector.broadcast %1 : f32 to vector<24x128xf32>
    %14 = arith.addf %13, %12 : vector<24x128xf32>
    %15 = vector.broadcast %3 : f32 to vector<24x128xf32>
    %16 = arith.mulf %15, %7 : vector<24x128xf32>
    %17 = arith.mulf %16, %7 : vector<24x128xf32>
    %18 = arith.addf %14, %17 : vector<24x128xf32>
    %19 = math.exp %18 : vector<24x128xf32>
    %c0_6 = arith.constant 0 : index
    %c0_7 = arith.constant 0 : index
    %20 = vector.load %arg3[%c0_6, %c0_7] : memref<24x128xf32, #tpu.memory_space<vmem>>, vector<24x128xf32>
    tpu.vector_store %arg3[%c0_6, %c0_7], %19 {strides = array<i32>} : memref<24x128xf32, #tpu.memory_space<vmem>>, vector<24x128xf32>,
    return
  }
  func.func @transform_0(%arg0: i32) -> i32 {
    %c0_i32 = arith.constant 0 : i32
    %c0_i32_0 = arith.constant 0 : i32
    return %c0_i32 : i32
  }
  func.func @transform_1(%arg0: i32) -> (i32, i32, i32) {
    %c0_i32 = arith.constant 0 : i32
    %c0_i32_0 = arith.constant 0 : i32
    %c0_i32_1 = arith.constant 0 : i32
    return %c0_i32, %arg0, %c0_i32_0 : i32, i32, i32
  }
  func.func @transform_2(%arg0: i32) -> (i32, i32) {
    %c0_i32 = arith.constant 0 : i32
    %c0_i32_0 = arith.constant 0 : i32
    return %arg0, %c0_i32 : i32, i32
  }
}

</mosaic_0001>

<llo_original>
// kernel: tpu_custom_call.1
$region0: #{tpu_custom_call.1}
  #allocation0 [shape = 'u32[]', space=smem, size = 0x4, offset = 0x4, fixed_abs, tag = 'smem constant byte address 0x4 - core index']
  #allocation1 [shape = 'u32[144,128]{1,0:T(1,128)}', space=vmem, size = 0x12000, scoped, tag = 'internal scratch']
  %s0 = inlined_call_operand.hbm [shape: f32[8], index: 0, kind: input, shape index: {}]
  %s1 = inlined_call_operand.hbm [shape: f32[2,24,128], index: 1, kind: input, shape index: {}]
  %s2 = inlined_call_operand.hbm [shape: f32[24,128], index: 2, kind: output, shape index: {}]
  %s3 = sld [smem:[#allocation0]]
  $region26: #{tpu_custom_call.1} parent=0
    _
  %s5 = ssub.s32 1, %s3
  %s6 = scalar_select 0, %s5, %s3
  $region1: #{tpu_custom_call.1} parent=0
    #allocation2 [shape = 'u8[512]{0}', space=smem, size = 0x200, scoped, tag = 'input window, operand 0, single buffered']
    #allocation3 [shape = 's32[1]{0}', space=sflag, size = 0x4, scoped, tag = 'scoped memory for tpu_custom_call.1']
    #allocation4 [shape = 's32[1]{0}', space=sflag, size = 0x4, scoped, tag = 'scoped memory for tpu_custom_call.1']
    #allocation5 [shape = 's32[1]{0}', space=sflag, size = 0x4, scoped, tag = 'scoped memory for tpu_custom_call.1']
    #allocation6 [shape = 'u8[24576]{0}', space=vmem, size = 0x6000, scoped, tag = 'input window, operand 1, single buffered']
    #allocation7 [shape = 'u8[12288]{0}', space=vmem, size = 0x3000, scoped, tag = 'output window, operand 0, single buffered']
    %7 = vsyncpa [#allocation5], 0
    %8 = vsyncpa [#allocation3], 0
    %9 = vsyncpa [#allocation4], 0
    // Predicated region
    $region2: #{tpu_custom_call.1} parent=1 // pred_check
      _
    $region3: #{tpu_custom_call.1} parent=1 // pred_check_branch
      %11 = sbr.rel (0) target = $region5
    $region4: #{tpu_custom_call.1} parent=1 // pred_region
      %s13 = ssub.s32 16, 16
      %14 = vsyncadd [#allocation5], %s13
      %17 = dma.hbm_to_smem %s0, 16, [#allocation2], [#allocation5]
    $region5: #{tpu_custom_call.1} parent=1 // pred_fallthru
      _
    // Predicated region
    $region6: #{tpu_custom_call.1} parent=1 // pred_check
      _
    $region7: #{tpu_custom_call.1} parent=1 // pred_check_branch
      %19 = sbr.rel (0) target = $region9
    $region8: #{tpu_custom_call.1} parent=1 // pred_region
      %s21 = ssub.s32 768, 768
      %22 = vsyncadd [#allocation3], %s21
      %s23 = sshll.u32 [#allocation6], 4
      %s24 = int_to_ptr.vmem [resolvable:$true] %s23
      %29 = dma.hbm_to_vmem [thread:$0]  %s1, 768, %s24, [#allocation3], 128, 128, 8
    $region9: #{tpu_custom_call.1} parent=1 // pred_fallthru
      _
    // Predicated region
    $region10: #{tpu_custom_call.1} parent=1 // pred_check
      _
    $region11: #{tpu_custom_call.1} parent=1 // pred_check_branch
      %31 = sbr.rel (0) target = $region13
    $region12: #{tpu_custom_call.1} parent=1 // pred_region
      %32 = dma.done [#allocation5], 16
    $region13: #{tpu_custom_call.1} parent=1 // pred_fallthru
      _
    // Predicated region
    $region14: #{tpu_custom_call.1} parent=1 // pred_check
      _
    $region15: #{tpu_custom_call.1} parent=1 // pred_check_branch
      %34 = sbr.rel (0) target = $region17
    $region16: #{tpu_custom_call.1} parent=1 // pred_region
      %35 = dma.done [#allocation3], 768
    $region17: #{tpu_custom_call.1} parent=1 // pred_fallthru
      _
    %36 = sfence
    %s37 = sld [smem:[#allocation2]]
    %s38 = sld [smem:[#allocation2 + $0x1]]
    %s39 = sld [smem:[#allocation2 + $0x2]]
    %s40 = sld [smem:[#allocation2 + $0x3]]
    %v41 = vld [vmem:[#allocation6] sm:$0xff]
    %v42 = vld [vmem:[#allocation6 + $0x8] sm:$0xff]
    %v43 = vld [vmem:[#allocation6 + $0x10] sm:$0xff]
    %s44 = scalar_lea.vmem [#allocation6], 24
    %v45 = vld [vmem:[%s44] sm:$0xff]
    %v46 = vld [vmem:[%s44 + $0x8] sm:$0xff]
    %v47 = vld [vmem:[%s44 + $0x10] sm:$0xff]
    %v48 = vstv %s37
    %v49 = vsub.f32 %v41, %v48
    %v50 = vsub.f32 %v42, %v48
    %v51 = vsub.f32 %v43, %v48
    %v52 = vand.u32 2147483647, %v49
    %vm53 = vcmp.le.f32.partialorder %v52, 0.7853982
    %vm54 = vcmp.lt.s32.totalorder %v49, 0
    %v55 = vand.u32 %v49, 2139095040
    %v56 = vshrl.u32 %v55, 23
    %v57 = vsub.s32 %v56, 127
    %v58 = vand.u32 2147483647, %v49
    %v59 = vand.u32 %v58, 8388607
    %v60 = vor.u32 %v59, 8388608
    %v61 = vsub.s32 0, %v60
    %v62 = vadd.s32 %v57, 1
    %vm63 = vcmp.gt.s32.totalorder %v62, 0
    %v64 = vsel %vm63, %v62, 0
    %v65 = vshrl.u32 %v64, 5
    %v66 = vand.u32 %v64, 31
    %v67 = vsub.s32 32, %v66
    %v68 = vshrl.u32 683565275, %v67
    %v69 = vshll.u32 683565275, %v66
    %v70 = vshrl.u32 2475754826, %v67
    %v71 = vor.u32 %v69, %v70
    %v72 = vshll.u32 2475754826, %v66
    %v73 = vshrl.u32 2131351028, %v67
    %v74 = vor.u32 %v72, %v73
    %v75 = vshll.u32 2131351028, %v66
    %v76 = vshrl.u32 2102212464, %v67
    %v77 = vor.u32 %v75, %v76
    %v78 = vshll.u32 2102212464, %v66
    %v79 = vshrl.u32 920167782, %v67
    %v80 = vor.u32 %v78, %v79
    %v81 = vshll.u32 920167782, %v66
    %v82 = vshrl.u32 1326507024, %v67
    %v83 = vor.u32 %v81, %v82
    %vm84 = vcmp.lt.s32.totalorder %v65, 1
    %vm85 = vcmp.lt.s32.totalorder %v65, 2
    %vm86 = vcmp.lt.s32.totalorder %v65, 3
    %vm87 = vcmp.lt.s32.totalorder %v65, 4
    %v88 = vsel %vm84, %v68, %v71
    %v89 = vsel %vm87, %v77, 2102212464
    %v90 = vsel %vm86, %v74, %v89
    %v91 = vsel %vm85, %v88, %v90
    %v92 = vsel %vm84, %v71, %v74
    %v93 = vsel %vm87, %v80, 920167782
    %v94 = vsel %vm86, %v77, %v93
    %v95 = vsel %vm85, %v92, %v94
    %v96 = vsel %vm84, %v74, %v77
    %v97 = vsel %vm87, %v83, 1326507024
    %v98 = vsel %vm86, %v80, %v97
    %v99 = vsel %vm85, %v96, %v98
    %v100 = vshll.u32 %v60, 8
    %v101 = vmul.u32.u64.compose %v100, %v99
    %v102 = vextract.low.u32 %v101
    %v103 = vextract.high.u32 %v101
    %v104 = vmul.u32.u64.compose %v100, %v95
    %v105 = vextract.low.u32 %v104
    %v106 = vextract.high.u32 %v104
    %v107 = vmul.u32 %v100, %v91
    %v108 = vadd.s32 %v103, %v105
    %vm109 = vc.u32 %v103, %v105
    %v110 = vadd.s32 %v106, 1
    %v111 = vsel %vm109, %v110, %v106
    %v112 = vadd.s32 %v107, %v111
    %v113 = vadd.s32 %v112, 536870912
    %v114 = vshrl.u32 %v113, 30
    %v115 = vshll.u32 %v114, 30
    %v116 = vsub.s32 %v112, %v115
    %vm117 = vcmp.lt.s32.totalorder %v116, 0
    %v118 = vsub.s32 0, %v116
    %v119 = vsel %vm117, %v118, %v116
    %v120 = vclz %v119
    %v121 = vsub.s32 %v120, 2
    %vm122 = vcmp.gt.s32.totalorder 0, %v121
    %v123 = vsel %vm122, 0, %v121
    %v124 = vsub.s32 32, %v123
    %v125 = vshll.u32 %v116, %v123
    %v126 = vshrl.u32 %v108, %v124
    %v127 = vor.u32 %v125, %v126
    %v128 = vsub.s32 4294967266, %v123
    %v129 = vadd.s32 %v128, 127
    %v130 = vshll.u32 %v129, 23
    %v131 = vor.u32 4788187, %v130
    %v132 = vand.u32 2147483647, %v131
    %v134 = vcvt.s32.f32 %v127
    %v135 = vmul.f32 %v134, %v132
    %v136 = vxor.u32 %v135, 2147483648
    %v137 = vsel %vm54, %v136, %v135
    %v138 = vsub.s32 4, %v114
    %v139 = vsel %vm54, %v138, %v114
    %v140 = vsel %vm53, %v49, %v137
    %v141 = vsel %vm53, 0, %v139
    %v142 = vcosq.f32.pop %v140
    %v143 = vsinq.f32.pop %v140
    %vm144 = vweird.f32 %v49
    %v145 = vand.u32 %v141, 3
    %vm146 = vcmp.lt.s32.totalorder %v145, 2
    %vm147 = vcmp.eq.s32.totalorder %v145, 0
    %v148 = vxor.u32 %v143, 2147483648
    %v149 = vsel %vm147, %v142, %v148
    %vm150 = vcmp.eq.s32.totalorder %v145, 2
    %v151 = vxor.u32 %v142, 2147483648
    %v152 = vsel %vm150, %v151, %v143
    %v153 = vsel %vm146, %v149, %v152
    %v154 = vsel %vm144, nan, %v153
    %v155 = vand.u32 2147483647, %v50
    %vm156 = vcmp.le.f32.partialorder %v155, 0.7853982
    %vm157 = vcmp.lt.s32.totalorder %v50, 0
    %v158 = vand.u32 %v50, 2139095040
    %v159 = vshrl.u32 %v158, 23
    %v160 = vsub.s32 %v159, 127
    %v161 = vand.u32 2147483647, %v50
    %v162 = vand.u32 %v161, 8388607
    %v163 = vor.u32 %v162, 8388608
    %v164 = vsub.s32 0, %v163
    %v165 = vadd.s32 %v160, 1
    %vm166 = vcmp.gt.s32.totalorder %v165, 0
    %v167 = vsel %vm166, %v165, 0
    %v168 = vshrl.u32 %v167, 5
    %v169 = vand.u32 %v167, 31
    %v170 = vsub.s32 32, %v169
    %v171 = vshrl.u32 683565275, %v170
    %v172 = vshll.u32 683565275, %v169
    %v173 = vshrl.u32 2475754826, %v170
    %v174 = vor.u32 %v172, %v173
    %v175 = vshll.u32 2475754826, %v169
    %v176 = vshrl.u32 2131351028, %v170
    %v177 = vor.u32 %v175, %v176
    %v178 = vshll.u32 2131351028, %v169
    %v179 = vshrl.u32 2102212464, %v170
    %v180 = vor.u32 %v178, %v179
    %v181 = vshll.u32 2102212464, %v169
    %v182 = vshrl.u32 920167782, %v170
    %v183 = vor.u32 %v181, %v182
    %v184 = vshll.u32 920167782, %v169
    %v185 = vshrl.u32 1326507024, %v170
    %v186 = vor.u32 %v184, %v185
    %vm187 = vcmp.lt.s32.totalorder %v168, 1
    %vm188 = vcmp.lt.s32.totalorder %v168, 2
    %vm189 = vcmp.lt.s32.totalorder %v168, 3
    %vm190 = vcmp.lt.s32.totalorder %v168, 4
    %v191 = vsel %vm187, %v171, %v174
    %v192 = vsel %vm190, %v180, 2102212464
    %v193 = vsel %vm189, %v177, %v192
    %v194 = vsel %vm188, %v191, %v193
    %v195 = vsel %vm187, %v174, %v177
    %v196 = vsel %vm190, %v183, 920167782
    %v197 = vsel %vm189, %v180, %v196
    %v198 = vsel %vm188, %v195, %v197
    %v199 = vsel %vm187, %v177, %v180
    %v200 = vsel %vm190, %v186, 1326507024
    %v201 = vsel %vm189, %v183, %v200
    %v202 = vsel %vm188, %v199, %v201
    %v203 = vshll.u32 %v163, 8
    %v204 = vmul.u32.u64.compose %v203, %v202
    %v205 = vextract.low.u32 %v204
    %v206 = vextract.high.u32 %v204
    %v207 = vmul.u32.u64.compose %v203, %v198
    %v208 = vextract.low.u32 %v207
    %v209 = vextract.high.u32 %v207
    %v210 = vmul.u32 %v203, %v194
    %v211 = vadd.s32 %v206, %v208
    %vm212 = vc.u32 %v206, %v208
    %v213 = vadd.s32 %v209, 1
    %v214 = vsel %vm212, %v213, %v209
    %v215 = vadd.s32 %v210, %v214
    %v216 = vadd.s32 %v215, 536870912
    %v217 = vshrl.u32 %v216, 30
    %v218 = vshll.u32 %v217, 30
    %v219 = vsub.s32 %v215, %v218
    %vm220 = vcmp.lt.s32.totalorder %v219, 0
    %v221 = vsub.s32 0, %v219
    %v222 = vsel %vm220, %v221, %v219
    %v223 = vclz %v222
    %v224 = vsub.s32 %v223, 2
    %vm225 = vcmp.gt.s32.totalorder 0, %v224
    %v226 = vsel %vm225, 0, %v224
    %v227 = vsub.s32 32, %v226
    %v228 = vshll.u32 %v219, %v226
    %v229 = vshrl.u32 %v211, %v227
    %v230 = vor.u32 %v228, %v229
    %v231 = vsub.s32 4294967266, %v226
    %v232 = vadd.s32 %v231, 127
    %v233 = vshll.u32 %v232, 23
    %v234 = vor.u32 4788187, %v233
    %v235 = vand.u32 2147483647, %v234
    %v237 = vcvt.s32.f32 %v230
    %v238 = vmul.f32 %v237, %v235
    %v239 = vxor.u32 %v238, 2147483648
    %v240 = vsel %vm157, %v239, %v238
    %v241 = vsub.s32 4, %v217
    %v242 = vsel %vm157, %v241, %v217
    %v243 = vsel %vm156, %v50, %v240
    %v244 = vsel %vm156, 0, %v242
    %v245 = vcosq.f32.pop %v243
    %v246 = vsinq.f32.pop %v243
    %vm247 = vweird.f32 %v50
    %v248 = vand.u32 %v244, 3
    %vm249 = vcmp.lt.s32.totalorder %v248, 2
    %vm250 = vcmp.eq.s32.totalorder %v248, 0
    %v251 = vxor.u32 %v246, 2147483648
    %v252 = vsel %vm250, %v245, %v251
    %vm253 = vcmp.eq.s32.totalorder %v248, 2
    %v254 = vxor.u32 %v245, 2147483648
    %v255 = vsel %vm253, %v254, %v246
    %v256 = vsel %vm249, %v252, %v255
    %v257 = vsel %vm247, nan, %v256
    %v258 = vand.u32 2147483647, %v51
    %vm259 = vcmp.le.f32.partialorder %v258, 0.7853982
    %vm260 = vcmp.lt.s32.totalorder %v51, 0
    %v261 = vand.u32 %v51, 2139095040
    %v262 = vshrl.u32 %v261, 23
    %v263 = vsub.s32 %v262, 127
    %v264 = vand.u32 2147483647, %v51
    %v265 = vand.u32 %v264, 8388607
    %v266 = vor.u32 %v265, 8388608
    %v267 = vsub.s32 0, %v266
    %v268 = vadd.s32 %v263, 1
    %vm269 = vcmp.gt.s32.totalorder %v268, 0
    %v270 = vsel %vm269, %v268, 0
    %v271 = vshrl.u32 %v270, 5
    %v272 = vand.u32 %v270, 31
    %v273 = vsub.s32 32, %v272
    %v274 = vshrl.u32 683565275, %v273
    %v275 = vshll.u32 683565275, %v272
    %v276 = vshrl.u32 2475754826, %v273
    %v277 = vor.u32 %v275, %v276
    %v278 = vshll.u32 2475754826, %v272
    %v279 = vshrl.u32 2131351028, %v273
    %v280 = vor.u32 %v278, %v279
    %v281 = vshll.u32 2131351028, %v272
    %v282 = vshrl.u32 2102212464, %v273
    %v283 = vor.u32 %v281, %v282
    %v284 = vshll.u32 2102212464, %v272
    %v285 = vshrl.u32 920167782, %v273
    %v286 = vor.u32 %v284, %v285
    %v287 = vshll.u32 920167782, %v272
    %v288 = vshrl.u32 1326507024, %v273
    %v289 = vor.u32 %v287, %v288
    %vm290 = vcmp.lt.s32.totalorder %v271, 1
    %vm291 = vcmp.lt.s32.totalorder %v271, 2
    %vm292 = vcmp.lt.s32.totalorder %v271, 3
    %vm293 = vcmp.lt.s32.totalorder %v271, 4
    %v294 = vsel %vm290, %v274, %v277
    %v295 = vsel %vm293, %v283, 2102212464
    %v296 = vsel %vm292, %v280, %v295
    %v297 = vsel %vm291, %v294, %v296
    %v298 = vsel %vm290, %v277, %v280
    %v299 = vsel %vm293, %v286, 920167782
    %v300 = vsel %vm292, %v283, %v299
    %v301 = vsel %vm291, %v298, %v300
    %v302 = vsel %vm290, %v280, %v283
    %v303 = vsel %vm293, %v289, 1326507024
    %v304 = vsel %vm292, %v286, %v303
    %v305 = vsel %vm291, %v302, %v304
    %v306 = vshll.u32 %v266, 8
    %v307 = vmul.u32.u64.compose %v306, %v305
    %v308 = vextract.low.u32 %v307
    %v309 = vextract.high.u32 %v307
    %v310 = vmul.u32.u64.compose %v306, %v301
    %v311 = vextract.low.u32 %v310
    %v312 = vextract.high.u32 %v310
    %v313 = vmul.u32 %v306, %v297
    %v314 = vadd.s32 %v309, %v311
    %vm315 = vc.u32 %v309, %v311
    %v316 = vadd.s32 %v312, 1
    %v317 = vsel %vm315, %v316, %v312
    %v318 = vadd.s32 %v313, %v317
    %v319 = vadd.s32 %v318, 536870912
    %v320 = vshrl.u32 %v319, 30
    %v321 = vshll.u32 %v320, 30
    %v322 = vsub.s32 %v318, %v321
    %vm323 = vcmp.lt.s32.totalorder %v322, 0
    %v324 = vsub.s32 0, %v322
    %v325 = vsel %vm323, %v324, %v322
    %v326 = vclz %v325
    %v327 = vsub.s32 %v326, 2
    %vm328 = vcmp.gt.s32.totalorder 0, %v327
    %v329 = vsel %vm328, 0, %v327
    %v330 = vsub.s32 32, %v329
    %v331 = vshll.u32 %v322, %v329
    %v332 = vshrl.u32 %v314, %v330
    %v333 = vor.u32 %v331, %v332
    %v334 = vsub.s32 4294967266, %v329
    %v335 = vadd.s32 %v334, 127
    %v336 = vshll.u32 %v335, 23
    %v337 = vor.u32 4788187, %v336
    %v338 = vand.u32 2147483647, %v337
    %v340 = vcvt.s32.f32 %v333
    %v341 = vmul.f32 %v340, %v338
    %v342 = vxor.u32 %v341, 2147483648
    %v343 = vsel %vm260, %v342, %v341
    %v344 = vsub.s32 4, %v320
    %v345 = vsel %vm260, %v344, %v320
    %v346 = vsel %vm259, %v51, %v343
    %v347 = vsel %vm259, 0, %v345
    %v348 = vcosq.f32.pop %v346
    %v349 = vsinq.f32.pop %v346
    %vm350 = vweird.f32 %v51
    %v351 = vand.u32 %v347, 3
    %vm352 = vcmp.lt.s32.totalorder %v351, 2
    %vm353 = vcmp.eq.s32.totalorder %v351, 0
    %v354 = vxor.u32 %v349, 2147483648
    %v355 = vsel %vm353, %v348, %v354
    %vm356 = vcmp.eq.s32.totalorder %v351, 2
    %v357 = vxor.u32 %v348, 2147483648
    %v358 = vsel %vm356, %v357, %v349
    %v359 = vsel %vm352, %v355, %v358
    %v360 = vsel %vm350, nan, %v359
    %v361 = vstv %s39
    %v362 = vmul.f32 %v361, %v154
    %v363 = vmul.f32 %v361, %v257
    %v364 = vmul.f32 %v361, %v360
    %v365 = vstv %s38
    %v366 = vadd.f32 %v365, %v362
    %v367 = vadd.f32 %v365, %v363
    %v368 = vadd.f32 %v365, %v364
    %v369 = vstv %s40
    %v370 = vmul.f32 %v369, %v45
    %v371 = vmul.f32 %v369, %v46
    %v372 = vmul.f32 %v369, %v47
    %v373 = vmul.f32 %v370, %v45
    %v374 = vmul.f32 %v371, %v46
    %v375 = vmul.f32 %v372, %v47
    %v376 = vadd.f32 %v366, %v373
    %v377 = vadd.f32 %v367, %v374
    %v378 = vadd.f32 %v368, %v375
    %v379 = vmul.f32 %v376, 1.442695
    %v380 = vpow.pop %v379
    %v381 = vmul.f32 %v377, 1.442695
    %v382 = vpow.pop %v381
    %v383 = vmul.f32 %v378, 1.442695
    %v384 = vpow.pop %v383
    %385 = vst [vmem:[#allocation7] sm:$0xff] %v380
    %386 = vst [vmem:[#allocation7 + $0x8] sm:$0xff] %v382
    %387 = vst [vmem:[#allocation7 + $0x10] sm:$0xff] %v384
    // Predicated region
    $region18: #{tpu_custom_call.1} parent=1 // pred_check
      _
    $region19: #{tpu_custom_call.1} parent=1 // pred_check_branch
      %389 = sbr.rel (0) target = $region21
    $region20: #{tpu_custom_call.1} parent=1 // pred_region
      %s391 = ssub.s32 384, 384
      %392 = vsyncadd [#allocation4], %s391
      %s393 = sshll.u32 [#allocation7], 4
      %s394 = int_to_ptr.vmem [resolvable:$true] %s393
      %399 = dma.vmem_to_hbm [thread:$0]  %s394, 384, %s2, [#allocation4], 128, 128, 8
    $region21: #{tpu_custom_call.1} parent=1 // pred_fallthru
      _
    // Predicated region
    $region22: #{tpu_custom_call.1} parent=1 // pred_check
      _
    $region23: #{tpu_custom_call.1} parent=1 // pred_check_branch
      %401 = sbr.rel (0) target = $region25
    $region24: #{tpu_custom_call.1} parent=1 // pred_region
      %402 = dma.done [#allocation4], 384
    $region25: #{tpu_custom_call.1} parent=1 // pred_fallthru
      _
    %403 = vsyncpa [#allocation3], 1
    %404 = vsyncpa [#allocation4], 1
    %405 = vsyncpa [#allocation5], 1

</llo_original>
